<compile_context>
chip_gen: v7x
topology: tpu7x:2x2x1
jax: 0.10.0
libtpu: 0.0.40
codegen_flags: <defaults>
</compile_context>

<pallas_src>
import jax
import jax.numpy as jnp
from jax.experimental import pallas as pl
from jax.experimental.pallas import tpu as pltpu


def _round_up(x: int, m: int) -> int:
    return ((x + m - 1) // m) * m


def make_mlp_reco_kernel(n_layers: int, compute_dtype):
    """Kernel for `n_layers` Linear layers (ReLU on all but the last)."""

    def kernel(*refs):
        # inputs: ue, ie, w0u, w0i, b0, (w1, b1, ...), then the output ref.
        ue_ref, ie_ref, w0u_ref, w0i_ref, b0_ref = refs[:5]
        n_rest_wb = 2 * (n_layers - 1)
        wb_refs = refs[5:5 + n_rest_wb]
        out_ref = refs[5 + n_rest_wb]

        # --- First layer: split-weight form of cat([ue, ie], 1) @ W0 + b0. ---
        x = (jnp.dot(ue_ref[...], w0u_ref[...],
                     preferred_element_type=jnp.float32)
             + jnp.dot(ie_ref[...], w0i_ref[...],
                       preferred_element_type=jnp.float32)
             + b0_ref[...])
        if n_layers > 1:
            x = jnp.maximum(x, 0.0)

        # --- Remaining Linear(+ReLU) stack; accumulate in f32. ---
        for l in range(1, n_layers):
            w = wb_refs[2 * (l - 1)][...]        # (in, out) compute_dtype
            b = wb_refs[2 * (l - 1) + 1][...]    # (1, out)  f32
            x = jnp.dot(x.astype(compute_dtype), w,
                        preferred_element_type=jnp.float32) + b
            if l < n_layers - 1:
                x = jnp.maximum(x, 0.0)

        # Last layer's W/b were padded to a 128-lane multiple -> unmasked vst.
        out_ref[...] = x.astype(out_ref.dtype)

    return kernel


def mlp_recommender_forward(u_ids, i_ids, params, *, tb=None,
                            param_dtype=jnp.float32, out_dtype=jnp.float32):
    """Pallas forward: U_ids (B,), I_ids (B,) -> (B, n_classes)."""
    user_table, item_table, layer_wbs = params
    B = int(u_ids.shape[0])
    D = int(user_table.shape[1])
    n_layers = len(layer_wbs)
    n_classes = int(layer_wbs[-1][0].shape[1])

    # --- Tile / padding geometry. -------------------------------------------
    is_bf16 = jnp.dtype(param_dtype) == jnp.dtype(jnp.bfloat16)
    row_align = 16 if is_bf16 else 8            # sublane packing factor
    if tb is None:
        tb = 256 if is_bf16 else 128            # MXU-friendly M on v6e/v7x
    tb = max(row_align, _round_up(tb, row_align))
    b_ceil = _round_up(B, row_align)
    tb = min(tb, b_ceil)
    # Keep the grid >= 2 when the batch allows it, so both v7x TCs get work.
    if tb >= b_ceil and b_ceil >= 2 * row_align:
        tb = _round_up(b_ceil // 2, row_align)
    b_pad = _round_up(B, tb)
    out_pad = _round_up(max(n_classes, 1), 128)  # lane-dense output width

    # --- Embedding gather in the wrapper (XLA gather), per perf review. ------
    # Ids are clamped so out-of-range ids can never read OOB (documented
    # divergence from the PyTorch reference, which would raise).
    u = jnp.clip(u_ids.astype(jnp.int32), 0, user_table.shape[0] - 1)
    i = jnp.clip(i_ids.astype(jnp.int32), 0, item_table.shape[0] - 1)
    ue = jnp.take(user_table.astype(param_dtype), u, axis=0)
    ie = jnp.take(item_table.astype(param_dtype), i, axis=0)
    if b_pad > B:                                # pad batch with zero rows
        ue = jnp.pad(ue, ((0, b_pad - B), (0, 0)))
        ie = jnp.pad(ie, ((0, b_pad - B), (0, 0)))

    # --- Weights: param_dtype for MXU operands, f32 biases. ------------------
    wbs = [(w.astype(param_dtype), b.reshape(1, -1).astype(jnp.float32))
           for w, b in layer_wbs]
    w_last, b_last = wbs[-1]
    pad_cols = out_pad - n_classes
    wbs[-1] = (jnp.pad(w_last, ((0, 0), (0, pad_cols))),
               jnp.pad(b_last, ((0, 0), (0, pad_cols))))
    # Split the first weight to avoid the lane-axis concat.
    w0, b0 = wbs[0]
    w0u, w0i = w0[:D], w0[D:]

    weight_inputs = [w0u, w0i, b0]
    for w, b in wbs[1:]:
        weight_inputs.append(w)
        weight_inputs.append(b)

    # --- Block specs: activations tiled over batch, weights whole-array. -----
    in_specs = [pl.BlockSpec((tb, D), lambda g: (g, 0)),
                pl.BlockSpec((tb, D), lambda g: (g, 0))]
    for t in weight_inputs:
        in_specs.append(pl.BlockSpec(t.shape, lambda g: (0, 0)))

    grid_spec = pltpu.PrefetchScalarGridSpec(
        num_scalar_prefetch=0,
        grid=(b_pad // tb,),
        in_specs=in_specs,
        out_specs=pl.BlockSpec((tb, out_pad), lambda g: (g, 0)),
        scratch_shapes=[],
    )

    # --- VMEM budget (explicit, v7x 64 MiB safe) and cost estimate. ----------
    itemsize_p = jnp.dtype(param_dtype).itemsize
    out_itemsize = jnp.dtype(out_dtype).itemsize
    widths = [D] + [w.shape[1] for w, _ in wbs]
    resident = (2 * 2 * tb * D * itemsize_p                      # ue/ie (2-buf)
                + 2 * tb * out_pad * out_itemsize                # output (2-buf)
                + 2 * sum(int(t.size) * t.dtype.itemsize
                          for t in weight_inputs)                # resident weights
                + 4 * tb * max(widths) * 4)                      # f32 intermediates
    vmem_limit = min(max(2 * resident, 32 * 1024 * 1024), 64 * 1024 * 1024)

    flops = 2 * b_pad * sum(w.shape[0] * w.shape[1] for w, _ in layer_wbs)
    bytes_accessed = (2 * b_pad * D * itemsize_p
                      + sum(int(t.size) * t.dtype.itemsize for t in weight_inputs)
                      + b_pad * out_pad * out_itemsize)
    cost = pl.CostEstimate(flops=flops, transcendentals=0,
                           bytes_accessed=bytes_accessed)

    kernel = make_mlp_reco_kernel(n_layers, param_dtype)
    out = pl.pallas_call(
        kernel,
        out_shape=jax.ShapeDtypeStruct((b_pad, out_pad), out_dtype),
        grid_spec=grid_spec,
        compiler_params=pltpu.CompilerParams(
            dimension_semantics=("parallel",),
            vmem_limit_bytes=int(vmem_limit)),
        cost_estimate=cost,
    )(ue, ie, *weight_inputs)

    return out[:B, :n_classes]


def init_params(key, n_users, n_items, embedding_dim=32, padding_idx=0,
                n_classes=1):
    """Deterministic synthetic params mirroring MLPRecommender.__init__."""
    k_u, k_i, k_rest = jax.random.split(key, 3)
    user_table = jax.random.normal(k_u, (n_users + 1, embedding_dim),
                                   jnp.float32) * 0.1
    user_table = user_table.at[padding_idx].set(0.0)
    item_table = jax.random.normal(k_i, (n_items + 1, embedding_dim),
                                   jnp.float32) * 0.1
    item_table = item_table.at[padding_idx].set(0.0)

    # Mirror the hidden-layer size construction loop from the PyTorch module.
    in_f = embedding_dim * 2
    out_f = embedding_dim
    min_out = max(2, n_classes) + 1
    dims = []
    while out_f > min_out:
        dims.append((in_f, out_f))
        in_f = out_f
        out_f = out_f // 4
    dims.append((in_f, n_classes))  # output layer

    layer_wbs = []
    for (fi, fo) in dims:
        k_w, k_b, k_rest = jax.random.split(k_rest, 3)
        bound = 1.0 / (fi ** 0.5)
        w = jax.random.uniform(k_w, (fi, fo), jnp.float32, -bound, bound)
        b = jax.random.uniform(k_b, (fo,), jnp.float32, -bound, bound)
        layer_wbs.append((w, b))
    return user_table, item_table, layer_wbs


def reference_forward(u_ids, i_ids, params):
    """Pure-JAX reference matching the PyTorch forward exactly."""
    user_table, item_table, layer_wbs = params
    ue = jnp.take(user_table, u_ids, axis=0)
    ie = jnp.take(item_table, i_ids, axis=0)
    x = jnp.concatenate([ue, ie], axis=1)
    n_layers = len(layer_wbs)
    for l, (w, b) in enumerate(layer_wbs):
        x = x @ w + b
        if l < n_layers - 1:
            x = jnp.maximum(x, 0.0)
    return x


if __name__ == "__main__":
    key = jax.random.PRNGKey(0)
    n_users, n_items, embedding_dim, n_classes = 50, 100, 32, 1
    batch = 24  # small, but exercises batch padding and a 2-step parallel grid

    k_params, k_u, k_i = jax.random.split(key, 3)
    params = init_params(k_params, n_users, n_items, embedding_dim,
                         padding_idx=0, n_classes=n_classes)

    u_ids = jax.random.randint(k_u, (batch,), 1, n_users + 1, jnp.int32)
    i_ids = jax.random.randint(k_i, (batch,), 1, n_items + 1, jnp.int32)

    out = mlp_recommender_forward(u_ids, i_ids, params)
    out = jax.block_until_ready(out)

    ref = reference_forward(u_ids, i_ids, params)
    assert out.shape == (batch, n_classes), out.shape
    assert jnp.allclose(out, ref, atol=1e-4, rtol=1e-4)

    print("KERNEL_OK")
</pallas_src>

<mosaic_0001>
module attributes {stable_mosaic.version = 11 : i64} {
  func.func @kernel(%arg0: i32, %arg1: memref<16x32xf32, #tpu.memory_space<vmem>>, %arg2: memref<16x32xf32, #tpu.memory_space<vmem>>, %arg3: memref<32x32xf32, #tpu.memory_space<vmem>>, %arg4: memref<32x32xf32, #tpu.memory_space<vmem>>, %arg5: memref<1x32xf32, #tpu.memory_space<vmem>>, %arg6: memref<32x8xf32, #tpu.memory_space<vmem>>, %arg7: memref<1x8xf32, #tpu.memory_space<vmem>>, %arg8: memref<8x128xf32, #tpu.memory_space<vmem>>, %arg9: memref<1x128xf32, #tpu.memory_space<vmem>>, %arg10: memref<16x128xf32, #tpu.memory_space<vmem>>) attributes {dimension_semantics = [#tpu.dimension_semantics<parallel>], iteration_bounds = array<i64: 2>, scalar_prefetch = 0 : i64, scratch_operands = 0 : i64, tpu.core_type = #tpu.core_type<tc>, window_params = [{transform_indices = @transform_0, window_bounds = array<i64: 16, 32>}, {transform_indices = @transform_1, window_bounds = array<i64: 16, 32>}, {pipeline_mode = #tpu.pipeline_mode<synchronous>, transform_indices = @transform_2, window_bounds = array<i64: 32, 32>}, {pipeline_mode = #tpu.pipeline_mode<synchronous>, transform_indices = @transform_3, window_bounds = array<i64: 32, 32>}, {pipeline_mode = #tpu.pipeline_mode<synchronous>, transform_indices = @transform_4, window_bounds = array<i64: 1, 32>}, {pipeline_mode = #tpu.pipeline_mode<synchronous>, transform_indices = @transform_5, window_bounds = array<i64: 32, 8>}, {pipeline_mode = #tpu.pipeline_mode<synchronous>, transform_indices = @transform_6, window_bounds = array<i64: 1, 8>}, {pipeline_mode = #tpu.pipeline_mode<synchronous>, transform_indices = @transform_7, window_bounds = array<i64: 8, 128>}, {pipeline_mode = #tpu.pipeline_mode<synchronous>, transform_indices = @transform_8, window_bounds = array<i64: 1, 128>}, {transform_indices = @transform_9, window_bounds = array<i64: 16, 128>}]} {
    %c0 = arith.constant 0 : index
    %c0_0 = arith.constant 0 : index
    %0 = vector.load %arg1[%c0, %c0_0] : memref<16x32xf32, #tpu.memory_space<vmem>>, vector<16x32xf32>
    %c0_1 = arith.constant 0 : index
    %c0_2 = arith.constant 0 : index
    %1 = vector.load %arg3[%c0_1, %c0_2] : memref<32x32xf32, #tpu.memory_space<vmem>>, vector<32x32xf32>
    %cst = arith.constant dense<0.000000e+00> : vector<16x32xf32>
    %2 = tpu.matmul %0, %1, %cst {dimension_numbers = #tpu.dot_dimension_numbers<[1], [0], [0], [1], [0, 0, 1, 1], [], []>} : vector<16x32xf32>, vector<32x32xf32>, vector<16x32xf32> -> vector<16x32xf32>
    %c0_3 = arith.constant 0 : index
    %c0_4 = arith.constant 0 : index
    %3 = vector.load %arg2[%c0_3, %c0_4] : memref<16x32xf32, #tpu.memory_space<vmem>>, vector<16x32xf32>
    %c0_5 = arith.constant 0 : index
    %c0_6 = arith.constant 0 : index
    %4 = vector.load %arg4[%c0_5, %c0_6] : memref<32x32xf32, #tpu.memory_space<vmem>>, vector<32x32xf32>
    %cst_7 = arith.constant dense<0.000000e+00> : vector<16x32xf32>
    %5 = tpu.matmul %3, %4, %cst_7 {dimension_numbers = #tpu.dot_dimension_numbers<[1], [0], [0], [1], [0, 0, 1, 1], [], []>} : vector<16x32xf32>, vector<32x32xf32>, vector<16x32xf32> -> vector<16x32xf32>
    %6 = arith.addf %2, %5 : vector<16x32xf32>
    %c0_8 = arith.constant 0 : index
    %c0_9 = arith.constant 0 : index
    %7 = vector.load %arg5[%c0_8, %c0_9] : memref<1x32xf32, #tpu.memory_space<vmem>>, vector<1x32xf32>
    %8 = vector.broadcast %7 : vector<1x32xf32> to vector<16x32xf32>
    %9 = arith.addf %6, %8 : vector<16x32xf32>
    %cst_10 = arith.constant 0.000000e+00 : f32
    %10 = vector.broadcast %cst_10 : f32 to vector<16x32xf32>
    %11 = arith.maximumf %9, %10 : vector<16x32xf32>
    %c0_11 = arith.constant 0 : index
    %c0_12 = arith.constant 0 : index
    %12 = vector.load %arg6[%c0_11, %c0_12] : memref<32x8xf32, #tpu.memory_space<vmem>>, vector<32x8xf32>
    %c0_13 = arith.constant 0 : index
    %c0_14 = arith.constant 0 : index
    %13 = vector.load %arg7[%c0_13, %c0_14] : memref<1x8xf32, #tpu.memory_space<vmem>>, vector<1x8xf32>
    %cst_15 = arith.constant dense<0.000000e+00> : vector<16x8xf32>
    %14 = tpu.matmul %11, %12, %cst_15 {dimension_numbers = #tpu.dot_dimension_numbers<[1], [0], [0], [1], [0, 0, 1, 1], [], []>} : vector<16x32xf32>, vector<32x8xf32>, vector<16x8xf32> -> vector<16x8xf32>
    %15 = vector.broadcast %13 : vector<1x8xf32> to vector<16x8xf32>
    %16 = arith.addf %14, %15 : vector<16x8xf32>
    %cst_16 = arith.constant 0.000000e+00 : f32
    %17 = vector.broadcast %cst_16 : f32 to vector<16x8xf32>
    %18 = arith.maximumf %16, %17 : vector<16x8xf32>
    %c0_17 = arith.constant 0 : index
    %c0_18 = arith.constant 0 : index
    %19 = vector.load %arg8[%c0_17, %c0_18] : memref<8x128xf32, #tpu.memory_space<vmem>>, vector<8x128xf32>
    %c0_19 = arith.constant 0 : index
    %c0_20 = arith.constant 0 : index
    %20 = vector.load %arg9[%c0_19, %c0_20] : memref<1x128xf32, #tpu.memory_space<vmem>>, vector<1x128xf32>
    %cst_21 = arith.constant dense<0.000000e+00> : vector<16x128xf32>
    %21 = tpu.matmul %18, %19, %cst_21 {dimension_numbers = #tpu.dot_dimension_numbers<[1], [0], [0], [1], [0, 0, 1, 1], [], []>} : vector<16x8xf32>, vector<8x128xf32>, vector<16x128xf32> -> vector<16x128xf32>
    %22 = vector.broadcast %20 : vector<1x128xf32> to vector<16x128xf32>
    %23 = arith.addf %21, %22 : vector<16x128xf32>
    %c0_22 = arith.constant 0 : index
    %c0_23 = arith.constant 0 : index
    %24 = vector.load %arg10[%c0_22, %c0_23] : memref<16x128xf32, #tpu.memory_space<vmem>>, vector<16x128xf32>
    tpu.vector_store %arg10[%c0_22, %c0_23], %23 {strides = array<i32>} : memref<16x128xf32, #tpu.memory_space<vmem>>, vector<16x128xf32>,
    return
  }
  func.func @transform_0(%arg0: i32) -> (i32, i32) {
    %c0_i32 = arith.constant 0 : i32
    %c0_i32_0 = arith.constant 0 : i32
    return %arg0, %c0_i32 : i32, i32
  }
  func.func @transform_1(%arg0: i32) -> (i32, i32) {
    %c0_i32 = arith.constant 0 : i32
    %c0_i32_0 = arith.constant 0 : i32
    return %arg0, %c0_i32 : i32, i32
  }
  func.func @transform_2(%arg0: i32) -> (i32, i32) {
    %c0_i32 = arith.constant 0 : i32
    %c0_i32_0 = arith.constant 0 : i32
    %c0_i32_1 = arith.constant 0 : i32
    return %c0_i32, %c0_i32_0 : i32, i32
  }
  func.func @transform_3(%arg0: i32) -> (i32, i32) {
    %c0_i32 = arith.constant 0 : i32
    %c0_i32_0 = arith.constant 0 : i32
    %c0_i32_1 = arith.constant 0 : i32
    return %c0_i32, %c0_i32_0 : i32, i32
  }
  func.func @transform_4(%arg0: i32) -> (i32, i32) {
    %c0_i32 = arith.constant 0 : i32
    %c0_i32_0 = arith.constant 0 : i32
    %c0_i32_1 = arith.constant 0 : i32
    return %c0_i32, %c0_i32_0 : i32, i32
  }
  func.func @transform_5(%arg0: i32) -> (i32, i32) {
    %c0_i32 = arith.constant 0 : i32
    %c0_i32_0 = arith.constant 0 : i32
    %c0_i32_1 = arith.constant 0 : i32
    return %c0_i32, %c0_i32_0 : i32, i32
  }
  func.func @transform_6(%arg0: i32) -> (i32, i32) {
    %c0_i32 = arith.constant 0 : i32
    %c0_i32_0 = arith.constant 0 : i32
    %c0_i32_1 = arith.constant 0 : i32
    return %c0_i32, %c0_i32_0 : i32, i32
  }
  func.func @transform_7(%arg0: i32) -> (i32, i32) {
    %c0_i32 = arith.constant 0 : i32
    %c0_i32_0 = arith.constant 0 : i32
    %c0_i32_1 = arith.constant 0 : i32
    return %c0_i32, %c0_i32_0 : i32, i32
  }
  func.func @transform_8(%arg0: i32) -> (i32, i32) {
    %c0_i32 = arith.constant 0 : i32
    %c0_i32_0 = arith.constant 0 : i32
    %c0_i32_1 = arith.constant 0 : i32
    return %c0_i32, %c0_i32_0 : i32, i32
  }
  func.func @transform_9(%arg0: i32) -> (i32, i32) {
    %c0_i32 = arith.constant 0 : i32
    %c0_i32_0 = arith.constant 0 : i32
    return %arg0, %c0_i32 : i32, i32
  }
}

</mosaic_0001>

<llo_original>
// kernel: tpu_custom_call.1
$region0: #{tpu_custom_call.1}
  #allocation0 [shape = 'u32[]', space=smem, size = 0x4, offset = 0x4, fixed_abs, tag = 'smem constant byte address 0x4 - core index']
  #allocation1 [shape = 'u32[144,128]{1,0:T(1,128)}', space=vmem, size = 0x12000, scoped, tag = 'internal scratch']
  %s0 = inlined_call_operand.vmem [shape: f32[32,32], index: 0, kind: input, shape index: {}]
  %s1 = inlined_call_operand.hbm [shape: f32[32,32], index: 1, kind: input, shape index: {}]
  %s2 = inlined_call_operand.hbm [shape: f32[32,32], index: 2, kind: input, shape index: {}]
  %s3 = inlined_call_operand.hbm [shape: f32[32,32], index: 3, kind: input, shape index: {}]
  %s4 = inlined_call_operand.vmem [shape: f32[1,32], index: 4, kind: input, shape index: {}]
  %s5 = inlined_call_operand.vmem [shape: f32[32,8], index: 5, kind: input, shape index: {}]
  %s6 = inlined_call_operand.vmem [shape: f32[1,8], index: 6, kind: input, shape index: {}]
  %s7 = inlined_call_operand.vmem [shape: f32[8,128], index: 7, kind: input, shape index: {}]
  %s8 = inlined_call_operand.vmem [shape: f32[1,128], index: 8, kind: input, shape index: {}]
  %s9 = inlined_call_operand.hbm [shape: f32[32,128], index: 9, kind: output, shape index: {}]
  %s10 = sld [smem:[#allocation0]]
  $region81: #{tpu_custom_call.1} parent=0
    _
  %s12 = ssub.s32 1, %s10
  %s13 = scalar_select 0, %s12, %s10
  $region1: #{tpu_custom_call.1} parent=0
    #allocation2 [shape = 'u8[16384]{0}', space=vmem, size = 0x4000, scoped, tag = 'input window, operand 1']
    #allocation3 [shape = 's32[2]{0}', space=sflag, size = 0x8, scoped, tag = 'scoped memory for tpu_custom_call.1']
    #allocation4 [shape = 's32[2]{0}', space=sflag, size = 0x8, scoped, tag = 'scoped memory for tpu_custom_call.1']
    #allocation5 [shape = 'u8[16384]{0}', space=vmem, size = 0x4000, scoped, tag = 'input window, operand 2, single buffered']
    #allocation6 [shape = 's32[1]{0}', space=sflag, size = 0x4, scoped, tag = 'scoped memory for tpu_custom_call.1']
    #allocation7 [shape = 'u8[16384]{0}', space=vmem, size = 0x4000, scoped, tag = 'input window, operand 3, single buffered']
    #allocation8 [shape = 'u8[16384]{0}', space=vmem, size = 0x4000, scoped, tag = 'output window, operand 0']
    %14 = vsyncpa [#allocation3], 0
    %s15 = scalar_lea.sflag [#allocation3], 1
    %16 = vsyncpa %s15, 0
    %17 = vsyncpa [#allocation6], 0
    %18 = vsyncpa [#allocation4], 0
    %s19 = scalar_lea.sflag [#allocation4], 1
    %20 = vsyncpa %s19, 0
    loop: start=0, step=1, limit=4
    $region2: #{tpu_custom_call.1} parent=1 // loop_pre_header
      _
    $region3: #{tpu_custom_call.1} parent=1 // loop_header
      %s22 = sphi 0, %s26
      %p23 = scmp.ge.s32.totalorder %s22, 4
      %s32 = sphi 0, %s34
      %s35 = sphi 0, %s32
      %s36 = sphi 0, %s35
      %s52 = sphi 0, %s36
      %s58 = sphi 0, %s60
      %s61 = sphi 0, %s58
      %s62 = sphi 0, %s61
      %s78 = sphi 0, %s62
      %s82 = sphi 0, %s82
      %s84 = sphi 0, %s82
      %s85 = sphi 0, %s84
      %s99 = sphi 0, %s85
      %s103 = sphi 0, %s103
      %s105 = sphi 0, %s103
      %s106 = sphi 0, %s105
      %s120 = sphi 0, %s106
      %s124 = sphi 0, %s124
      %s126 = sphi 0, %s124
      %s127 = sphi 0, %s126
      %s141 = sphi 0, %s127
      %s145 = sphi 0, %s145
      %s147 = sphi 0, %s145
      %s148 = sphi 0, %s147
      %s162 = sphi 0, %s148
      %s166 = sphi 0, %s166
      %s168 = sphi 0, %s166
      %s169 = sphi 0, %s168
      %s183 = sphi 0, %s169
      %s187 = sphi 0, %s187
      %s189 = sphi 0, %s187
      %s190 = sphi 0, %s189
      %s204 = sphi 0, %s190
      %s208 = sphi 0, %s208
      %s210 = sphi 0, %s208
      %s211 = sphi 0, %s210
      %s225 = sphi 0, %s211
      %s231 = sphi 0, %s233
      %s234 = sphi 0, %s231
      %s235 = sphi 0, %s234
      %s251 = sphi 0, %s235
    $region4: #{tpu_custom_call.1} parent=1 // loop_header_branch
      %25 = sbr.rel (%p23) target = $region8
    $region5: #{tpu_custom_call.1} parent=1 // loop_body
      %s27 = ssub.s32 %s22, 1
      %s28 = ssub.s32 %s22, 2
      %s29 = sadd.s32 %s22, 1
      %s30 = ssub.s32 %s22, %s29
      %p31 = scmp.eq.s32.totalorder %s30, 0
      %s33 = sadd.s32 %s32, 1
      %s34 = scalar_select %p31, %s32, %s33
      %p37 = pneg %p31
      %p38 = scmp.eq.s32.totalorder %s22, 1
      %p39 = por %p37, %p38
      %p40 = scmp.ne.s32.totalorder %s32, %s35
      %p41 = scmp.eq.s32.totalorder %s22, 0
      %p42 = por %p40, %p41
      %p43 = scmp.ne.s32.totalorder %s32, %s35
      %p44 = scmp.eq.s32.totalorder %s27, 1
      %p45 = por %p43, %p44
      %p46 = scmp.ne.s32.totalorder %s35, %s36
      %p47 = scmp.eq.s32.totalorder %s27, 0
      %p48 = por %p46, %p47
      %p49 = scmp.ne.s32.totalorder %s35, %s36
      %p50 = scmp.eq.s32.totalorder %s28, 1
      %p51 = por %p49, %p50
      %p53 = scmp.ne.s32.totalorder %s36, %s52
      %p54 = scmp.eq.s32.totalorder %s28, 0
      %p55 = por %p53, %p54
      %s56 = ssub.s32 %s22, %s29
      %p57 = scmp.eq.s32.totalorder %s56, 0
      %s59 = sadd.s32 %s58, 1
      %s60 = scalar_select %p57, %s58, %s59
      %p63 = pneg %p57
      %p64 = scmp.eq.s32.totalorder %s22, 1
      %p65 = por %p63, %p64
      %p66 = scmp.ne.s32.totalorder %s58, %s61
      %p67 = scmp.eq.s32.totalorder %s22, 0
      %p68 = por %p66, %p67
      %p69 = scmp.ne.s32.totalorder %s58, %s61
      %p70 = scmp.eq.s32.totalorder %s27, 1
      %p71 = por %p69, %p70
      %p72 = scmp.ne.s32.totalorder %s61, %s62
      %p73 = scmp.eq.s32.totalorder %s27, 0
      %p74 = por %p72, %p73
      %p75 = scmp.ne.s32.totalorder %s61, %s62
      %p76 = scmp.eq.s32.totalorder %s28, 1
      %p77 = por %p75, %p76
      %p79 = scmp.ne.s32.totalorder %s62, %s78
      %p80 = scmp.eq.s32.totalorder %s28, 0
      %p81 = por %p79, %p80
      %s83 = sadd.s32 %s82, 1
      %p86 = scmp.eq.s32.totalorder %s22, 1
      %p87 = scmp.ne.s32.totalorder %s82, %s84
      %p88 = scmp.eq.s32.totalorder %s22, 0
      %p89 = por %p87, %p88
      %p90 = scmp.ne.s32.totalorder %s82, %s84
      %p91 = scmp.eq.s32.totalorder %s27, 1
      %p92 = por %p90, %p91
      %p93 = scmp.ne.s32.totalorder %s84, %s85
      %p94 = scmp.eq.s32.totalorder %s27, 0
      %p95 = por %p93, %p94
      %p96 = scmp.ne.s32.totalorder %s84, %s85
      %p97 = scmp.eq.s32.totalorder %s28, 1
      %p98 = por %p96, %p97
      %p100 = scmp.ne.s32.totalorder %s85, %s99
      %p101 = scmp.eq.s32.totalorder %s28, 0
      %p102 = por %p100, %p101
      %s104 = sadd.s32 %s103, 1
      %p107 = scmp.eq.s32.totalorder %s22, 1
      %p108 = scmp.ne.s32.totalorder %s103, %s105
      %p109 = scmp.eq.s32.totalorder %s22, 0
      %p110 = por %p108, %p109
      %p111 = scmp.ne.s32.totalorder %s103, %s105
      %p112 = scmp.eq.s32.totalorder %s27, 1
      %p113 = por %p111, %p112
      %p114 = scmp.ne.s32.totalorder %s105, %s106
      %p115 = scmp.eq.s32.totalorder %s27, 0
      %p116 = por %p114, %p115
      %p117 = scmp.ne.s32.totalorder %s105, %s106
      %p118 = scmp.eq.s32.totalorder %s28, 1
      %p119 = por %p117, %p118
      %p121 = scmp.ne.s32.totalorder %s106, %s120
      %p122 = scmp.eq.s32.totalorder %s28, 0
      %p123 = por %p121, %p122
      %s125 = sadd.s32 %s124, 1
      %p128 = scmp.eq.s32.totalorder %s22, 1
      %p129 = scmp.ne.s32.totalorder %s124, %s126
      %p130 = scmp.eq.s32.totalorder %s22, 0
      %p131 = por %p129, %p130
      %p132 = scmp.ne.s32.totalorder %s124, %s126
      %p133 = scmp.eq.s32.totalorder %s27, 1
      %p134 = por %p132, %p133
      %p135 = scmp.ne.s32.totalorder %s126, %s127
      %p136 = scmp.eq.s32.totalorder %s27, 0
      %p137 = por %p135, %p136
      %p138 = scmp.ne.s32.totalorder %s126, %s127
      %p139 = scmp.eq.s32.totalorder %s28, 1
      %p140 = por %p138, %p139
      %p142 = scmp.ne.s32.totalorder %s127, %s141
      %p143 = scmp.eq.s32.totalorder %s28, 0
      %p144 = por %p142, %p143
      %s146 = sadd.s32 %s145, 1
      %p149 = scmp.eq.s32.totalorder %s22, 1
      %p150 = scmp.ne.s32.totalorder %s145, %s147
      %p151 = scmp.eq.s32.totalorder %s22, 0
      %p152 = por %p150, %p151
      %p153 = scmp.ne.s32.totalorder %s145, %s147
      %p154 = scmp.eq.s32.totalorder %s27, 1
      %p155 = por %p153, %p154
      %p156 = scmp.ne.s32.totalorder %s147, %s148
      %p157 = scmp.eq.s32.totalorder %s27, 0
      %p158 = por %p156, %p157
      %p159 = scmp.ne.s32.totalorder %s147, %s148
      %p160 = scmp.eq.s32.totalorder %s28, 1
      %p161 = por %p159, %p160
      %p163 = scmp.ne.s32.totalorder %s148, %s162
      %p164 = scmp.eq.s32.totalorder %s28, 0
      %p165 = por %p163, %p164
      %s167 = sadd.s32 %s166, 1
      %p170 = scmp.eq.s32.totalorder %s22, 1
      %p171 = scmp.ne.s32.totalorder %s166, %s168
      %p172 = scmp.eq.s32.totalorder %s22, 0
      %p173 = por %p171, %p172
      %p174 = scmp.ne.s32.totalorder %s166, %s168
      %p175 = scmp.eq.s32.totalorder %s27, 1
      %p176 = por %p174, %p175
      %p177 = scmp.ne.s32.totalorder %s168, %s169
      %p178 = scmp.eq.s32.totalorder %s27, 0
      %p179 = por %p177, %p178
      %p180 = scmp.ne.s32.totalorder %s168, %s169
      %p181 = scmp.eq.s32.totalorder %s28, 1
      %p182 = por %p180, %p181
      %p184 = scmp.ne.s32.totalorder %s169, %s183
      %p185 = scmp.eq.s32.totalorder %s28, 0
      %p186 = por %p184, %p185
      %s188 = sadd.s32 %s187, 1
      %p191 = scmp.eq.s32.totalorder %s22, 1
      %p192 = scmp.ne.s32.totalorder %s187, %s189
      %p193 = scmp.eq.s32.totalorder %s22, 0
      %p194 = por %p192, %p193
      %p195 = scmp.ne.s32.totalorder %s187, %s189
      %p196 = scmp.eq.s32.totalorder %s27, 1
      %p197 = por %p195, %p196
      %p198 = scmp.ne.s32.totalorder %s189, %s190
      %p199 = scmp.eq.s32.totalorder %s27, 0
      %p200 = por %p198, %p199
      %p201 = scmp.ne.s32.totalorder %s189, %s190
      %p202 = scmp.eq.s32.totalorder %s28, 1
      %p203 = por %p201, %p202
      %p205 = scmp.ne.s32.totalorder %s190, %s204
      %p206 = scmp.eq.s32.totalorder %s28, 0
      %p207 = por %p205, %p206
      %s209 = sadd.s32 %s208, 1
      %p212 = scmp.eq.s32.totalorder %s22, 1
      %p213 = scmp.ne.s32.totalorder %s208, %s210
      %p214 = scmp.eq.s32.totalorder %s22, 0
      %p215 = por %p213, %p214
      %p216 = scmp.ne.s32.totalorder %s208, %s210
      %p217 = scmp.eq.s32.totalorder %s27, 1
      %p218 = por %p216, %p217
      %p219 = scmp.ne.s32.totalorder %s210, %s211
      %p220 = scmp.eq.s32.totalorder %s27, 0
      %p221 = por %p219, %p220
      %p222 = scmp.ne.s32.totalorder %s210, %s211
      %p223 = scmp.eq.s32.totalorder %s28, 1
      %p224 = por %p222, %p223
      %p226 = scmp.ne.s32.totalorder %s211, %s225
      %p227 = scmp.eq.s32.totalorder %s28, 0
      %p228 = por %p226, %p227
      %s229 = ssub.s32 %s22, %s29
      %p230 = scmp.eq.s32.totalorder %s229, 0
      %s232 = sadd.s32 %s231, 1
      %s233 = scalar_select %p230, %s231, %s232
      %p236 = pneg %p230
      %p237 = scmp.eq.s32.totalorder %s22, 1
      %p238 = por %p236, %p237
      %p239 = scmp.ne.s32.totalorder %s231, %s234
      %p240 = scmp.eq.s32.totalorder %s22, 0
      %p241 = por %p239, %p240
      %p242 = scmp.ne.s32.totalorder %s231, %s234
      %p243 = scmp.eq.s32.totalorder %s27, 1
      %p244 = por %p242, %p243
      %p245 = scmp.ne.s32.totalorder %s234, %s235
      %p246 = scmp.eq.s32.totalorder %s27, 0
      %p247 = por %p245, %p246
      %p248 = scmp.ne.s32.totalorder %s234, %s235
      %p249 = scmp.eq.s32.totalorder %s28, 1
      %p250 = por %p248, %p249
      %p252 = scmp.ne.s32.totalorder %s235, %s251
      %p253 = scmp.eq.s32.totalorder %s28, 0
      %p254 = por %p252, %p253
      %p255 = scmp.le.s32.totalorder 1, %s22
      %p256 = scmp.lt.s32.totalorder %s22, 3
      %p257 = pnand %p255, %p256
      %p258 = pneg %p257
      // Predicated region
      $region9: #{tpu_custom_call.1} parent=5 // pred_check
        _
      $region10: #{tpu_custom_call.1} parent=5 // pred_check_branch
        %260 = sbr.rel (%p257) target = $region12
      $region11: #{tpu_custom_call.1} parent=5 // pred_region
        %s261 = ssub.s32 %s22, 1
        // Predicated region
        $region13: #{tpu_custom_call.1} parent=11 // pred_check
          %p262 = pneg %p95
        $region14: #{tpu_custom_call.1} parent=11 // pred_check_branch
          %264 = sbr.rel (%p262) target = $region16
        $region15: #{tpu_custom_call.1} parent=11 // pred_region
          %s266 = ssub.s32 512, 512
          %267 = vsyncadd [#allocation6], %s266
          %s268 = sshll.u32 [#allocation5], 4
          %s269 = int_to_ptr.vmem [resolvable:$true] %s268
          %274 = dma.hbm_to_vmem [thread:$0]  %s2, 512, %s269, [#allocation6], 128, 128, 8
        $region16: #{tpu_custom_call.1} parent=11 // pred_fallthru
          _
        // Predicated region
        $region17: #{tpu_custom_call.1} parent=11 // pred_check
          %p275 = pneg %p116
        $region18: #{tpu_custom_call.1} parent=11 // pred_check_branch
          %277 = sbr.rel (%p275) target = $region20
        $region19: #{tpu_custom_call.1} parent=11 // pred_region
          %s279 = ssub.s32 512, 512
          %280 = vsyncadd [#allocation6], %s279
          %s281 = sshll.u32 [#allocation7], 4
          %s282 = int_to_ptr.vmem [resolvable:$true] %s281
          %287 = dma.hbm_to_vmem [thread:$0]  %s3, 512, %s282, [#allocation6], 128, 128, 8
        $region20: #{tpu_custom_call.1} parent=11 // pred_fallthru
          _
        // Predicated region
        $region21: #{tpu_custom_call.1} parent=11 // pred_check
          %p288 = pneg %p137
        $region22: #{tpu_custom_call.1} parent=11 // pred_check_branch
          %290 = sbr.rel (%p288) target = $region24
        $region23: #{tpu_custom_call.1} parent=11 // pred_region
          _
        $region24: #{tpu_custom_call.1} parent=11 // pred_fallthru
          _
        // Predicated region
        $region25: #{tpu_custom_call.1} parent=11 // pred_check
          %p291 = pneg %p158
        $region26: #{tpu_custom_call.1} parent=11 // pred_check_branch
          %293 = sbr.rel (%p291) target = $region28
        $region27: #{tpu_custom_call.1} parent=11 // pred_region
          _
        $region28: #{tpu_custom_call.1} parent=11 // pred_fallthru
          _
        // Predicated region
        $region29: #{tpu_custom_call.1} parent=11 // pred_check
          %p294 = pneg %p179
        $region30: #{tpu_custom_call.1} parent=11 // pred_check_branch
          %296 = sbr.rel (%p294) target = $region32
        $region31: #{tpu_custom_call.1} parent=11 // pred_region
          _
        $region32: #{tpu_custom_call.1} parent=11 // pred_fallthru
          _
        // Predicated region
        $region33: #{tpu_custom_call.1} parent=11 // pred_check
          %p297 = pneg %p200
        $region34: #{tpu_custom_call.1} parent=11 // pred_check_branch
          %299 = sbr.rel (%p297) target = $region36
        $region35: #{tpu_custom_call.1} parent=11 // pred_region
          _
        $region36: #{tpu_custom_call.1} parent=11 // pred_fallthru
          _
        // Predicated region
        $region37: #{tpu_custom_call.1} parent=11 // pred_check
          %p300 = pneg %p221
        $region38: #{tpu_custom_call.1} parent=11 // pred_check_branch
          %302 = sbr.rel (%p300) target = $region40
        $region39: #{tpu_custom_call.1} parent=11 // pred_region
          _
        $region40: #{tpu_custom_call.1} parent=11 // pred_fallthru
          _
      $region12: #{tpu_custom_call.1} parent=5 // pred_fallthru
        _
      %p303 = scmp.lt.s32.totalorder %s22, 2
      // Predicated region
      $region41: #{tpu_custom_call.1} parent=5 // pred_check
        %p304 = pneg %p303
      $region42: #{tpu_custom_call.1} parent=5 // pred_check_branch
        %306 = sbr.rel (%p304) target = $region44
      $region43: #{tpu_custom_call.1} parent=5 // pred_region
        // Predicated region
        $region45: #{tpu_custom_call.1} parent=43 // pred_check
          %p307 = pneg %p42
        $region46: #{tpu_custom_call.1} parent=43 // pred_check_branch
          %309 = sbr.rel (%p307) target = $region48
        $region47: #{tpu_custom_call.1} parent=43 // pred_region
          %s310 = smul.u32 2, %s22
          %p311 = scmp.lt.s32.totalorder %s310, 3
          %s312 = scalar_select %p311, %s310, 3
          %s313 = smul.addr %s312, 8
          %s314 = scalar_lea.vmem %s0, %s313
          %s315 = smul.u32 2, %s22
        $region48: #{tpu_custom_call.1} parent=43 // pred_fallthru
          _
        // Predicated region
        $region49: #{tpu_custom_call.1} parent=43 // pred_check
          %p316 = pneg %p68
        $region50: #{tpu_custom_call.1} parent=43 // pred_check_branch
          %318 = sbr.rel (%p316) target = $region52
        $region51: #{tpu_custom_call.1} parent=43 // pred_region
          %s319 = sand.u32 %s58, 1
          %s320 = scalar_lea.sflag [#allocation3], %s319
          %s321 = sand.u32 %s58, 1
          %s322 = smul.addr %s321, 16
          %s323 = scalar_lea.vmem [#allocation2], %s322
          %s324 = smul.u32 2, %s22
          %s326 = ssub.s32 256, 256
          %327 = vsyncadd %s320, %s326
          %s328 = smul.addr %s324, 128
          %s329 = scalar_lea.hbm %s1, %s328
          %s330 = sshll.u32 %s323, 4
          %s331 = int_to_ptr.vmem [resolvable:$true] %s330
          %336 = dma.hbm_to_vmem [thread:$0]  %s329, 256, %s331, %s320, 128, 128, 8
        $region52: #{tpu_custom_call.1} parent=43 // pred_fallthru
          _
      $region44: #{tpu_custom_call.1} parent=5 // pred_fallthru
        _
      %p337 = scmp.le.s32.totalorder 1, %s22
      %p338 = scmp.lt.s32.totalorder %s22, 3
      %p339 = pnand %p337, %p338
      %p340 = pneg %p339
      // Predicated region
      $region53: #{tpu_custom_call.1} parent=5 // pred_check
        _
      $region54: #{tpu_custom_call.1} parent=5 // pred_check_branch
        %342 = sbr.rel (%p339) target = $region56
      $region55: #{tpu_custom_call.1} parent=5 // pred_region
        %s343 = ssub.s32 %s22, 1
        %s344 = sand.u32 %s61, 1
        %s345 = scalar_lea.sflag [#allocation3], %s344
        %s346 = sand.u32 %s61, 1
        %s347 = smul.addr %s346, 16
        %s348 = scalar_lea.vmem [#allocation2], %s347
        // Predicated region
        $region57: #{tpu_custom_call.1} parent=55 // pred_check
          %p349 = pneg %p74
        $region58: #{tpu_custom_call.1} parent=55 // pred_check_branch
          %351 = sbr.rel (%p349) target = $region60
        $region59: #{tpu_custom_call.1} parent=55 // pred_region
          %352 = dma.done %s345, 256
        $region60: #{tpu_custom_call.1} parent=55 // pred_fallthru
          _
        // Predicated region
        $region61: #{tpu_custom_call.1} parent=55 // pred_check
          %p353 = pneg %p95
        $region62: #{tpu_custom_call.1} parent=55 // pred_check_branch
          %355 = sbr.rel (%p353) target = $region64
        $region63: #{tpu_custom_call.1} parent=55 // pred_region
          %356 = dma.done [#allocation6], 512
        $region64: #{tpu_custom_call.1} parent=55 // pred_fallthru
          _
        // Predicated region
        $region65: #{tpu_custom_call.1} parent=55 // pred_check
          %p357 = pneg %p116
        $region66: #{tpu_custom_call.1} parent=55 // pred_check_branch
          %359 = sbr.rel (%p357) target = $region68
        $region67: #{tpu_custom_call.1} parent=55 // pred_region
          %360 = dma.done [#allocation6], 512
        $region68: #{tpu_custom_call.1} parent=55 // pred_fallthru
          _
        %s361 = smul.u32 2, %s27
        %p362 = scmp.lt.s32.totalorder %s361, 3
        %s363 = scalar_select %p362, %s361, 3
        %s364 = smul.addr %s363, 8
        %s365 = scalar_lea.vmem %s0, %s364
        %p366 = pneg %p48
        %p367 = pneg %p45
        %s368 = sand.u32 %s61, 1
        %s369 = scalar_lea.sflag [#allocation3], %s368
        %s370 = sand.u32 %s61, 1
        %s371 = smul.addr %s370, 16
        %s372 = scalar_lea.vmem [#allocation2], %s371
        %p373 = pneg %p74
        %p374 = pneg %p71
        %p375 = pneg %p95
        %p376 = pneg %p92
        %p377 = pneg %p116
        %p378 = pneg %p113
        %p379 = pneg %p137
        %p380 = pneg %p134
        %p381 = pneg %p158
        %p382 = pneg %p155
        %p383 = pneg %p179
        %p384 = pneg %p176
        %p385 = pneg %p200
        %p386 = pneg %p197
        %p387 = pneg %p221
        %p388 = pneg %p218
        %p389 = pneg %p247
        %p390 = pneg %p244
        %s391 = sand.u32 %s234, 1
        %s392 = scalar_lea.sflag [#allocation4], %s391
        %s393 = sand.u32 %s234, 1
        %s394 = smul.addr %s393, 16
        %s395 = scalar_lea.vmem [#allocation8], %s394
        %s396 = smul.u32 2, %s27
        %p397 = scmp.lt.s32.totalorder %s396, 3
        %s398 = scalar_select %p397, %s396, 3
        %s399 = smul.addr %s398, 8
        %s400 = scalar_lea.vmem %s0, %s399
        %s401 = smul.u32 2, %s27
        %s402 = smul.u32 2, %s27
        %s403 = smul.u32 2, %s27
        %v404 = vld [vmem:[%s400] sm:$0xff]
        %v405 = vld [vmem:[%s400 + $0x8] sm:$0xff]
        %v406 = vld [vmem:[#allocation5] sm:$0xff]
        %v407 = vld [vmem:[#allocation5 + $0x8] sm:$0xff]
        %v408 = vld [vmem:[#allocation5 + $0x10] sm:$0xff]
        %v409 = vld [vmem:[#allocation5 + $0x18] sm:$0xff]
        %v410 = vld [vmem:[%s348] sm:$0xff]
        %v411 = vld [vmem:[%s348 + $0x8] sm:$0xff]
        %v412 = vld [vmem:[#allocation7] sm:$0xff]
        %v413 = vld [vmem:[#allocation7 + $0x8] sm:$0xff]
        %v414 = vld [vmem:[#allocation7 + $0x10] sm:$0xff]
        %v415 = vld [vmem:[#allocation7 + $0x18] sm:$0xff]
        %vm416 = vcmask 261120
        %v418 = vsel %vm416, %v410, 0
        %v421 = vsel %vm416, %v411, 0
        %423 = vmatprep.subr.mxu0 0.0
        %424 = vmatpush1.msra.mxu0 %v412
        %425 = vmatprep.subr.mxu0 0.0
        %426 = vmatpush1.msra.mxu0 %v413
        %427 = vmatprep.subr.mxu0 0.0
        %428 = vmatpush1.msra.mxu0 %v414
        %429 = vmatprep.subr.mxu0 0.0
        %430 = vmatpush1.msra.mxu0 %v415
        %431 = vmatprep.subr.mxu0 0.0
        %432 = vmatpush1.msra.mxu0 0.0
        %433 = vmatprep.subr.mxu0 0.0
        %434 = vmatpush1.msra.mxu0 0.0
        %435 = vmatprep.subr.mxu0 0.0
        %436 = vmatpush1.msra.mxu0 0.0
        %437 = vmatprep.subr.mxu0 0.0
        %438 = vmatpush1.msra.mxu0 0.0
        %439 = vmatprep.subr.mxu0 0.0
        %440 = vmatpush1.msra.mxu0 0.0
        %441 = vmatprep.subr.mxu0 0.0
        %442 = vmatpush1.msra.mxu0 0.0
        %443 = vmatprep.subr.mxu0 0.0
        %444 = vmatpush1.msra.mxu0 0.0
        %445 = vmatprep.subr.mxu0 0.0
        %446 = vmatpush1.msra.mxu0 0.0
        %447 = vmatprep.subr.mxu0 0.0
        %448 = vmatpush1.msra.mxu0 0.0
        %449 = vmatprep.subr.mxu0 0.0
        %450 = vmatpush1.msra.mxu0 0.0
        %451 = vmatprep.subr.mxu0 0.0
        %452 = vmatpush1.msra.mxu0 0.0
        %453 = vmatprep.subr.mxu0 0.0
        %454 = vmatpush1.msra.mxu0 0.0
        %455 = vmatprep.subr.mxu0 0.0
        %456 = vmatpush1.msra.mxu0 0.0
        %457 = vmatprep.subr.mxu0 0.0
        %458 = vmatpush1.msra.mxu0 0.0
        %459 = vmatprep.subr.mxu0 0.0
        %460 = vmatpush1.msra.mxu0 0.0
        %461 = vmatprep.subr.mxu0 0.0
        %462 = vmatpush1.msra.mxu0 0.0
        %463 = vmatprep.subr.mxu0 0.0
        %464 = vmatpush1.msra.mxu0 0.0
        %465 = vmatprep.subr.mxu0 0.0
        %466 = vmatpush1.msra.mxu0 0.0
        %467 = vmatprep.subr.mxu0 0.0
        %468 = vmatpush1.msra.mxu0 0.0
        %469 = vmatprep.subr.mxu0 0.0
        %470 = vmatpush1.msra.mxu0 0.0
        %471 = vmatprep.subr.mxu0 0.0
        %472 = vmatpush1.msra.mxu0 0.0
        %473 = vmatprep.subr.mxu0 0.0
        %474 = vmatpush1.msra.mxu0 0.0
        %475 = vmatprep.subr.mxu0 0.0
        %476 = vmatpush1.msra.mxu0 0.0
        %477 = vmatprep.subr.mxu0 0.0
        %478 = vmatpush1.msra.mxu0 0.0
        %479 = vmatprep.subr.mxu0 0.0
        %480 = vmatpush1.msra.mxu0 0.0
        %481 = vmatprep.subr.mxu0 0.0
        %482 = vmatpush1.msra.mxu0 0.0
        %483 = vmatprep.subr.mxu0 0.0
        %484 = vmatpush1.msra.mxu0 0.0
        %485 = vmatprep.subr.mxu0 0.0
        %486 = vmatpush1.msra.mxu0 0.0
        %487 = vmatprep.mubr.f32.mxu0 0.0
        %488 = vmatmul.mubr.f32.gmra.mrb[0].mxu0 %v418
        %v489 = vpop.f32.mrb[0].mxu0
        %v490 = vadd.f32 0.0, %v489
        %v491 = vpop.f32.mrb[0].mxu0
        %492 = vmatprep.mubr.f32.mxu0 0.0
        %493 = vmatmul.mubr.f32.gmra.mrb[0].mxu0 %v421
        %v494 = vpop.f32.mrb[0].mxu0
        %v495 = vadd.f32 0.0, %v494
        %v496 = vpop.f32.mrb[0].mxu0
        %497 = vdwg.mxu0
        %v499 = vsel %vm416, %v404, 0
        %v502 = vsel %vm416, %v405, 0
        %504 = vmatprep.subr.mxu0 0.0
        %505 = vmatpush1.msra.mxu0 %v406
        %506 = vmatprep.subr.mxu0 0.0
        %507 = vmatpush1.msra.mxu0 %v407
        %508 = vmatprep.subr.mxu0 0.0
        %509 = vmatpush1.msra.mxu0 %v408
        %510 = vmatprep.subr.mxu0 0.0
        %511 = vmatpush1.msra.mxu0 %v409
        %512 = vmatprep.subr.mxu0 0.0
        %513 = vmatpush1.msra.mxu0 0.0
        %514 = vmatprep.subr.mxu0 0.0
        %515 = vmatpush1.msra.mxu0 0.0
        %516 = vmatprep.subr.mxu0 0.0
        %517 = vmatpush1.msra.mxu0 0.0
        %518 = vmatprep.subr.mxu0 0.0
        %519 = vmatpush1.msra.mxu0 0.0
        %520 = vmatprep.subr.mxu0 0.0
        %521 = vmatpush1.msra.mxu0 0.0
        %522 = vmatprep.subr.mxu0 0.0
        %523 = vmatpush1.msra.mxu0 0.0
        %524 = vmatprep.subr.mxu0 0.0
        %525 = vmatpush1.msra.mxu0 0.0
        %526 = vmatprep.subr.mxu0 0.0
        %527 = vmatpush1.msra.mxu0 0.0
        %528 = vmatprep.subr.mxu0 0.0
        %529 = vmatpush1.msra.mxu0 0.0
        %530 = vmatprep.subr.mxu0 0.0
        %531 = vmatpush1.msra.mxu0 0.0
        %532 = vmatprep.subr.mxu0 0.0
        %533 = vmatpush1.msra.mxu0 0.0
        %534 = vmatprep.subr.mxu0 0.0
        %535 = vmatpush1.msra.mxu0 0.0
        %536 = vmatprep.subr.mxu0 0.0
        %537 = vmatpush1.msra.mxu0 0.0
        %538 = vmatprep.subr.mxu0 0.0
        %539 = vmatpush1.msra.mxu0 0.0
        %540 = vmatprep.subr.mxu0 0.0
        %541 = vmatpush1.msra.mxu0 0.0
        %542 = vmatprep.subr.mxu0 0.0
        %543 = vmatpush1.msra.mxu0 0.0
        %544 = vmatprep.subr.mxu0 0.0
        %545 = vmatpush1.msra.mxu0 0.0
        %546 = vmatprep.subr.mxu0 0.0
        %547 = vmatpush1.msra.mxu0 0.0
        %548 = vmatprep.subr.mxu0 0.0
        %549 = vmatpush1.msra.mxu0 0.0
        %550 = vmatprep.subr.mxu0 0.0
        %551 = vmatpush1.msra.mxu0 0.0
        %552 = vmatprep.subr.mxu0 0.0
        %553 = vmatpush1.msra.mxu0 0.0
        %554 = vmatprep.subr.mxu0 0.0
        %555 = vmatpush1.msra.mxu0 0.0
        %556 = vmatprep.subr.mxu0 0.0
        %557 = vmatpush1.msra.mxu0 0.0
        %558 = vmatprep.subr.mxu0 0.0
        %559 = vmatpush1.msra.mxu0 0.0
        %560 = vmatprep.subr.mxu0 0.0
        %561 = vmatpush1.msra.mxu0 0.0
        %562 = vmatprep.subr.mxu0 0.0
        %563 = vmatpush1.msra.mxu0 0.0
        %564 = vmatprep.subr.mxu0 0.0
        %565 = vmatpush1.msra.mxu0 0.0
        %566 = vmatprep.subr.mxu0 0.0
        %567 = vmatpush1.msra.mxu0 0.0
        %568 = vmatprep.mubr.f32.mxu0 0.0
        %569 = vmatmul.mubr.f32.gmra.mrb[0].mxu0 %v499
        %v570 = vpop.f32.mrb[0].mxu0
        %v571 = vadd.f32 %v490, %v570
        %v572 = vpop.f32.mrb[0].mxu0
        %573 = vmatprep.mubr.f32.mxu0 0.0
        %574 = vmatmul.mubr.f32.gmra.mrb[0].mxu0 %v502
        %v575 = vpop.f32.mrb[0].mxu0
        %v576 = vadd.f32 %v495, %v575
        %v577 = vpop.f32.mrb[0].mxu0
        %578 = vdwg.mxu0
        %v579 = vld [vmem:[%s4] sm:$0x1]
        %v581 = vlaneseq
        %v582 = vshrl.u32 %v581, 7
        %v583 = vsub.s32 0, %v582
        %v584 = vrot.slane %v579, %v583
        %v586 = vadd.f32 %v571, %v584
        %v587 = vadd.f32 %v576, %v584
        %v588 = vmax.f32 %v586, 0.0
        %v589 = vmax.f32 %v587, 0.0
        %v590 = vld [vmem:[%s5] sm:$0xff]
        %v591 = vld [vmem:[%s5 + $0x8] sm:$0xff]
        %v592 = vld [vmem:[%s5 + $0x10] sm:$0xff]
        %v593 = vld [vmem:[%s5 + $0x18] sm:$0xff]
        %v594 = vld [vmem:[%s6] sm:$0x1]
        %v596 = vlaneseq
        %v597 = vshrl.u32 %v596, 7
        %v598 = vsub.s32 0, %v597
        %v599 = vrot.slane %v594, %v598
        %v602 = vsel %vm416, %v588, 0
        %v605 = vsel %vm416, %v589, 0
        %607 = vmatprep.subr.mxu0 0.0
        %608 = vmatpush1.msra.mxu0 %v590
        %609 = vmatprep.subr.mxu0 0.0
        %610 = vmatpush1.msra.mxu0 %v591
        %611 = vmatprep.subr.mxu0 0.0
        %612 = vmatpush1.msra.mxu0 %v592
        %613 = vmatprep.subr.mxu0 0.0
        %614 = vmatpush1.msra.mxu0 %v593
        %615 = vmatprep.subr.mxu0 0.0
        %616 = vmatpush1.msra.mxu0 0.0
        %617 = vmatprep.subr.mxu0 0.0
        %618 = vmatpush1.msra.mxu0 0.0
        %619 = vmatprep.subr.mxu0 0.0
        %620 = vmatpush1.msra.mxu0 0.0
        %621 = vmatprep.subr.mxu0 0.0
        %622 = vmatpush1.msra.mxu0 0.0
        %623 = vmatprep.subr.mxu0 0.0
        %624 = vmatpush1.msra.mxu0 0.0
        %625 = vmatprep.subr.mxu0 0.0
        %626 = vmatpush1.msra.mxu0 0.0
        %627 = vmatprep.subr.mxu0 0.0
        %628 = vmatpush1.msra.mxu0 0.0
        %629 = vmatprep.subr.mxu0 0.0
        %630 = vmatpush1.msra.mxu0 0.0
        %631 = vmatprep.subr.mxu0 0.0
        %632 = vmatpush1.msra.mxu0 0.0
        %633 = vmatprep.subr.mxu0 0.0
        %634 = vmatpush1.msra.mxu0 0.0
        %635 = vmatprep.subr.mxu0 0.0
        %636 = vmatpush1.msra.mxu0 0.0
        %637 = vmatprep.subr.mxu0 0.0
        %638 = vmatpush1.msra.mxu0 0.0
        %639 = vmatprep.subr.mxu0 0.0
        %640 = vmatpush1.msra.mxu0 0.0
        %641 = vmatprep.subr.mxu0 0.0
        %642 = vmatpush1.msra.mxu0 0.0
        %643 = vmatprep.subr.mxu0 0.0
        %644 = vmatpush1.msra.mxu0 0.0
        %645 = vmatprep.subr.mxu0 0.0
        %646 = vmatpush1.msra.mxu0 0.0
        %647 = vmatprep.subr.mxu0 0.0
        %648 = vmatpush1.msra.mxu0 0.0
        %649 = vmatprep.subr.mxu0 0.0
        %650 = vmatpush1.msra.mxu0 0.0
        %651 = vmatprep.subr.mxu0 0.0
        %652 = vmatpush1.msra.mxu0 0.0
        %653 = vmatprep.subr.mxu0 0.0
        %654 = vmatpush1.msra.mxu0 0.0
        %655 = vmatprep.subr.mxu0 0.0
        %656 = vmatpush1.msra.mxu0 0.0
        %657 = vmatprep.subr.mxu0 0.0
        %658 = vmatpush1.msra.mxu0 0.0
        %659 = vmatprep.subr.mxu0 0.0
        %660 = vmatpush1.msra.mxu0 0.0
        %661 = vmatprep.subr.mxu0 0.0
        %662 = vmatpush1.msra.mxu0 0.0
        %663 = vmatprep.subr.mxu0 0.0
        %664 = vmatpush1.msra.mxu0 0.0
        %665 = vmatprep.subr.mxu0 0.0
        %666 = vmatpush1.msra.mxu0 0.0
        %667 = vmatprep.subr.mxu0 0.0
        %668 = vmatpush1.msra.mxu0 0.0
        %669 = vmatprep.subr.mxu0 0.0
        %670 = vmatpush1.msra.mxu0 0.0
        %671 = vmatprep.mubr.f32.mxu0 0.0
        %672 = vmatmul.mubr.f32.gmra.mrb[0].mxu0 %v602
        %v673 = vpop.f32.mrb[0].mxu0
        %v674 = vadd.f32 %v599, %v673
        %v675 = vpop.f32.mrb[0].mxu0
        %676 = vmatprep.mubr.f32.mxu0 0.0
        %677 = vmatmul.mubr.f32.gmra.mrb[0].mxu0 %v605
        %v678 = vpop.f32.mrb[0].mxu0
        %v679 = vadd.f32 %v599, %v678
        %v680 = vpop.f32.mrb[0].mxu0
        %681 = vdwg.mxu0
        %v682 = vmax.f32 %v674, 0.0
        %v683 = vmax.f32 %v679, 0.0
        %v684 = vld [vmem:[%s7] sm:$0xff]
        %v685 = vld [vmem:[%s8] sm:$0x1]
        %v687 = vlaneseq
        %v688 = vshrl.u32 %v687, 7
        %v689 = vsub.s32 0, %v688
        %v690 = vrot.slane %v685, %v689
        %vm692 = vcmask 64512
        %v694 = vsel %vm692, %v682, 0
        %v697 = vsel %vm692, %v683, 0
        %699 = vmatprep.subr.mxu0 0.0
        %700 = vmatpush1.msra.mxu0 %v684
        %701 = vmatprep.subr.mxu0 0.0
        %702 = vmatpush1.msra.mxu0 0.0
        %703 = vmatprep.subr.mxu0 0.0
        %704 = vmatpush1.msra.mxu0 0.0
        %705 = vmatprep.subr.mxu0 0.0
        %706 = vmatpush1.msra.mxu0 0.0
        %707 = vmatprep.subr.mxu0 0.0
        %708 = vmatpush1.msra.mxu0 0.0
        %709 = vmatprep.subr.mxu0 0.0
        %710 = vmatpush1.msra.mxu0 0.0
        %711 = vmatprep.subr.mxu0 0.0
        %712 = vmatpush1.msra.mxu0 0.0
        %713 = vmatprep.subr.mxu0 0.0
        %714 = vmatpush1.msra.mxu0 0.0
        %715 = vmatprep.subr.mxu0 0.0
        %716 = vmatpush1.msra.mxu0 0.0
        %717 = vmatprep.subr.mxu0 0.0
        %718 = vmatpush1.msra.mxu0 0.0
        %719 = vmatprep.subr.mxu0 0.0
        %720 = vmatpush1.msra.mxu0 0.0
        %721 = vmatprep.subr.mxu0 0.0
        %722 = vmatpush1.msra.mxu0 0.0
        %723 = vmatprep.subr.mxu0 0.0
        %724 = vmatpush1.msra.mxu0 0.0
        %725 = vmatprep.subr.mxu0 0.0
        %726 = vmatpush1.msra.mxu0 0.0
        %727 = vmatprep.subr.mxu0 0.0
        %728 = vmatpush1.msra.mxu0 0.0
        %729 = vmatprep.subr.mxu0 0.0
        %730 = vmatpush1.msra.mxu0 0.0
        %731 = vmatprep.subr.mxu0 0.0
        %732 = vmatpush1.msra.mxu0 0.0
        %733 = vmatprep.subr.mxu0 0.0
        %734 = vmatpush1.msra.mxu0 0.0
        %735 = vmatprep.subr.mxu0 0.0
        %736 = vmatpush1.msra.mxu0 0.0
        %737 = vmatprep.subr.mxu0 0.0
        %738 = vmatpush1.msra.mxu0 0.0
        %739 = vmatprep.subr.mxu0 0.0
        %740 = vmatpush1.msra.mxu0 0.0
        %741 = vmatprep.subr.mxu0 0.0
        %742 = vmatpush1.msra.mxu0 0.0
        %743 = vmatprep.subr.mxu0 0.0
        %744 = vmatpush1.msra.mxu0 0.0
        %745 = vmatprep.subr.mxu0 0.0
        %746 = vmatpush1.msra.mxu0 0.0
        %747 = vmatprep.subr.mxu0 0.0
        %748 = vmatpush1.msra.mxu0 0.0
        %749 = vmatprep.subr.mxu0 0.0
        %750 = vmatpush1.msra.mxu0 0.0
        %751 = vmatprep.subr.mxu0 0.0
        %752 = vmatpush1.msra.mxu0 0.0
        %753 = vmatprep.subr.mxu0 0.0
        %754 = vmatpush1.msra.mxu0 0.0
        %755 = vmatprep.subr.mxu0 0.0
        %756 = vmatpush1.msra.mxu0 0.0
        %757 = vmatprep.subr.mxu0 0.0
        %758 = vmatpush1.msra.mxu0 0.0
        %759 = vmatprep.subr.mxu0 0.0
        %760 = vmatpush1.msra.mxu0 0.0
        %761 = vmatprep.subr.mxu0 0.0
        %762 = vmatpush1.msra.mxu0 0.0
        %763 = vmatprep.mubr.f32.mxu0 0.0
        %764 = vmatmul.mubr.f32.gmra.mrb[0].mxu0 %v694
        %v765 = vpop.f32.mrb[0].mxu0
        %v766 = vadd.f32 %v690, %v765
        %v767 = vpop.f32.mrb[0].mxu0
        %768 = vmatprep.mubr.f32.mxu0 0.0
        %769 = vmatmul.mubr.f32.gmra.mrb[0].mxu0 %v697
        %v770 = vpop.f32.mrb[0].mxu0
        %v771 = vadd.f32 %v690, %v770
        %v772 = vpop.f32.mrb[0].mxu0
        %773 = vdwg.mxu0
        %774 = vst [vmem:[%s395] sm:$0xff] %v766
        %775 = vst [vmem:[%s395 + $0x8] sm:$0xff] %v771
        %s776 = sand.u32 %s234, 1
        %s777 = scalar_lea.sflag [#allocation4], %s776
        %s778 = sand.u32 %s234, 1
        %s779 = smul.addr %s778, 16
        %s780 = scalar_lea.vmem [#allocation8], %s779
        // Predicated region
        $region69: #{tpu_custom_call.1} parent=55 // pred_check
          %p781 = pneg %p244
        $region70: #{tpu_custom_call.1} parent=55 // pred_check_branch
          %783 = sbr.rel (%p781) target = $region72
        $region71: #{tpu_custom_call.1} parent=55 // pred_region
          %s784 = smul.u32 2, %s27
          %s786 = ssub.s32 256, 256
          %787 = vsyncadd %s777, %s786
          %s788 = smul.addr %s784, 128
          %s789 = scalar_lea.hbm %s9, %s788
          %s790 = sshll.u32 %s780, 4
          %s791 = int_to_ptr.vmem [resolvable:$true] %s790
          %796 = dma.vmem_to_hbm [thread:$0]  %s791, 256, %s789, %s777, 128, 128, 8
        $region72: #{tpu_custom_call.1} parent=55 // pred_fallthru
          _
      $region56: #{tpu_custom_call.1} parent=5 // pred_fallthru
        _
      %p797 = scmp.le.s32.totalorder 2, %s22
      // Predicated region
      $region73: #{tpu_custom_call.1} parent=5 // pred_check
        %p798 = pneg %p797
      $region74: #{tpu_custom_call.1} parent=5 // pred_check_branch
        %800 = sbr.rel (%p798) target = $region76
      $region75: #{tpu_custom_call.1} parent=5 // pred_region
        %s801 = ssub.s32 %s22, 2
        // Predicated region
        $region77: #{tpu_custom_call.1} parent=75 // pred_check
          %p802 = pneg %p250
        $region78: #{tpu_custom_call.1} parent=75 // pred_check_branch
          %804 = sbr.rel (%p802) target = $region80
        $region79: #{tpu_custom_call.1} parent=75 // pred_region
          %s805 = sand.u32 %s235, 1
          %s806 = scalar_lea.sflag [#allocation4], %s805
          %s807 = sand.u32 %s235, 1
          %s808 = smul.addr %s807, 16
          %s809 = scalar_lea.vmem [#allocation8], %s808
          %810 = dma.done %s806, 256
        $region80: #{tpu_custom_call.1} parent=75 // pred_fallthru
          _
      $region76: #{tpu_custom_call.1} parent=5 // pred_fallthru
        _
    $region6: #{tpu_custom_call.1} parent=1 // loop_footer
      %s26 = sadd.s32 1, %s22
    $region7: #{tpu_custom_call.1} parent=1 // loop_footer_branch
      %21 = sbr.rel target = $region3
    $region8: #{tpu_custom_call.1} parent=1 // loop_exit
      _
    %811 = vsyncpa [#allocation3], 1
    %s812 = scalar_lea.sflag [#allocation3], 1
    %813 = vsyncpa %s812, 1
    %814 = vsyncpa [#allocation6], 1
    %815 = vsyncpa [#allocation4], 1
    %s816 = scalar_lea.sflag [#allocation4], 1
    %817 = vsyncpa %s816, 1

</llo_original>
